<compile_context>
chip_gen: v5e
topology: v5e:2x2
jax: 0.10.0
libtpu: 0.0.40
codegen_flags: <defaults>
</compile_context>

<pallas_src>
import jax
import jax.numpy as jnp
from jax.experimental import pallas as pl
from jax.experimental.pallas import tpu as pltpu


def _round_up(x, m):
    return (x + m - 1) // m * m


def _mlp_kernel(x_ref, w1_ref, b1_ref, w2_ref, o_ref):
    # fc1: x @ w1 + b1, ReLU  (MXU matmul with f32 accumulation, VPU bias+relu)
    h = jnp.dot(x_ref[...], w1_ref[...], preferred_element_type=jnp.float32)
    h = jnp.maximum(h + b1_ref[...], 0.0)          # (1, hidden_p) broadcast
    # fc2: h @ w2 (no bias), lane-dense (action padded to 128) output store
    o_ref[...] = jnp.dot(h, w2_ref[...],
                         preferred_element_type=jnp.float32).astype(o_ref.dtype)


def net_forward(x, w1, b1, w2, *, tm=256):
    """Pallas forward for Net: relu(x @ w1 + b1) @ w2.

    x : (batch, obs_dim)            f32
    w1: (obs_dim, hidden)           f32
    b1: (hidden,)                   f32
    w2: (hidden, action)            f32
    returns (batch, action)         f32
    """
    batch, obs_dim = x.shape
    obs_w1, hidden = w1.shape
    hidden_w2, action = w2.shape
    assert obs_w1 == obs_dim and hidden_w2 == hidden

    # ---- lane-dense padding of hidden/action (layout plumbing in wrapper) ----
    hidden_p = _round_up(hidden, 128)
    action_p = _round_up(action, 128)

    # ---- batch tiling: TM multiple of 8 (and ideally of 128), pad batch ----
    batch_p8 = _round_up(batch, 8)
    tm = max(8, min(_round_up(tm, 8), batch_p8))
    batch_p = _round_up(batch_p8, tm)
    grid_m = batch_p // tm

    x_p = jnp.zeros((batch_p, obs_dim), x.dtype).at[:batch, :].set(x)
    w1_p = jnp.zeros((obs_dim, hidden_p), w1.dtype).at[:, :hidden].set(w1)
    b1_p = jnp.zeros((1, hidden_p), b1.dtype).at[0, :hidden].set(b1)
    w2_p = jnp.zeros((hidden_p, action_p), w2.dtype).at[:hidden, :action].set(w2)

    # ---- VMEM budget: 2x buffered x/out tiles + resident weights + margin ----
    itemsize = 4
    working = (2 * (tm * obs_dim + tm * action_p)
               + 2 * (obs_dim * hidden_p + hidden_p + hidden_p * action_p))
    vmem_bytes = working * itemsize * 2 + (1 << 20)
    vmem_bytes = int(min(max(vmem_bytes, 16 << 20), 64 << 20))  # safe on v5e..v7x

    out_p = pl.pallas_call(
        _mlp_kernel,
        out_shape=jax.ShapeDtypeStruct((batch_p, action_p), x.dtype),
        grid_spec=pltpu.PrefetchScalarGridSpec(
            num_scalar_prefetch=0,
            grid=(grid_m,),
            in_specs=[
                pl.BlockSpec((tm, obs_dim), lambda i: (i, 0)),       # x tile
                pl.BlockSpec((obs_dim, hidden_p), lambda i: (0, 0)),  # w1 resident
                pl.BlockSpec((1, hidden_p), lambda i: (0, 0)),        # b1 resident
                pl.BlockSpec((hidden_p, action_p), lambda i: (0, 0)),  # w2 resident
            ],
            out_specs=pl.BlockSpec((tm, action_p), lambda i: (i, 0)),
        ),
        compiler_params=pltpu.CompilerParams(
            dimension_semantics=("parallel",),
            vmem_limit_bytes=vmem_bytes,
        ),
    )(x_p, w1_p, b1_p, w2_p)

    return out_p[:batch, :action]


def init_params(key, obs_dim, action_dim, hidden_dim):
    """Deterministic synthetic init (Kaiming-uniform-ish like torch defaults)."""
    k1, k2, k3 = jax.random.split(key, 3)
    bound1 = 1.0 / jnp.sqrt(obs_dim)
    bound2 = 1.0 / jnp.sqrt(hidden_dim)
    w1 = jax.random.uniform(k1, (obs_dim, hidden_dim), jnp.float32, -bound1, bound1)
    b1 = jax.random.uniform(k2, (hidden_dim,), jnp.float32, -bound1, bound1)
    w2 = jax.random.uniform(k3, (hidden_dim, action_dim), jnp.float32, -bound2, bound2)
    return w1, b1, w2


if __name__ == "__main__":
    key = jax.random.PRNGKey(0)
    kx, kp = jax.random.split(key)

    # Small but tiling-exercising shapes; hidden_dim=256 matches the PyTorch default.
    batch, obs_dim, action_dim, hidden_dim = 256, 16, 8, 256
    x = jax.random.normal(kx, (batch, obs_dim), jnp.float32)
    w1, b1, w2 = init_params(kp, obs_dim, action_dim, hidden_dim)

    # tm=128 -> grid of 2 batch tiles (double-buffered, "parallel" axis).
    out = jax.block_until_ready(net_forward(x, w1, b1, w2, tm=128))

    # Reference check in plain JAX (same math as the PyTorch forward).
    ref = jnp.maximum(x @ w1 + b1, 0.0) @ w2
    assert out.shape == (batch, action_dim)
    assert jnp.allclose(out, ref, atol=1e-3, rtol=1e-3), (
        float(jnp.max(jnp.abs(out - ref))))

    print("KERNEL_OK")
</pallas_src>

<mosaic_0001>
module attributes {stable_mosaic.version = 11 : i64} {
  func.func @_mlp_kernel(%arg0: i32, %arg1: memref<128x16xf32, #tpu.memory_space<vmem>>, %arg2: memref<16x256xf32, #tpu.memory_space<vmem>>, %arg3: memref<1x256xf32, #tpu.memory_space<vmem>>, %arg4: memref<256x128xf32, #tpu.memory_space<vmem>>, %arg5: memref<128x128xf32, #tpu.memory_space<vmem>>) attributes {dimension_semantics = [#tpu.dimension_semantics<parallel>], iteration_bounds = array<i64: 2>, scalar_prefetch = 0 : i64, scratch_operands = 0 : i64, tpu.core_type = #tpu.core_type<tc>, window_params = [{transform_indices = @transform_0, window_bounds = array<i64: 128, 16>}, {pipeline_mode = #tpu.pipeline_mode<synchronous>, transform_indices = @transform_1, window_bounds = array<i64: 16, 256>}, {pipeline_mode = #tpu.pipeline_mode<synchronous>, transform_indices = @transform_2, window_bounds = array<i64: 1, 256>}, {pipeline_mode = #tpu.pipeline_mode<synchronous>, transform_indices = @transform_3, window_bounds = array<i64: 256, 128>}, {transform_indices = @transform_4, window_bounds = array<i64: 128, 128>}]} {
    %c0 = arith.constant 0 : index
    %c0_0 = arith.constant 0 : index
    %0 = vector.load %arg1[%c0, %c0_0] : memref<128x16xf32, #tpu.memory_space<vmem>>, vector<128x16xf32>
    %c0_1 = arith.constant 0 : index
    %c0_2 = arith.constant 0 : index
    %1 = vector.load %arg2[%c0_1, %c0_2] : memref<16x256xf32, #tpu.memory_space<vmem>>, vector<16x256xf32>
    %cst = arith.constant dense<0.000000e+00> : vector<128x256xf32>
    %2 = tpu.matmul %0, %1, %cst {dimension_numbers = #tpu.dot_dimension_numbers<[1], [0], [0], [1], [0, 0, 1, 1], [], []>} : vector<128x16xf32>, vector<16x256xf32>, vector<128x256xf32> -> vector<128x256xf32>
    %c0_3 = arith.constant 0 : index
    %c0_4 = arith.constant 0 : index
    %3 = vector.load %arg3[%c0_3, %c0_4] : memref<1x256xf32, #tpu.memory_space<vmem>>, vector<1x256xf32>
    %4 = vector.broadcast %3 : vector<1x256xf32> to vector<128x256xf32>
    %5 = arith.addf %2, %4 : vector<128x256xf32>
    %cst_5 = arith.constant 0.000000e+00 : f32
    %6 = vector.broadcast %cst_5 : f32 to vector<128x256xf32>
    %7 = arith.maximumf %5, %6 : vector<128x256xf32>
    %c0_6 = arith.constant 0 : index
    %c0_7 = arith.constant 0 : index
    %8 = vector.load %arg4[%c0_6, %c0_7] : memref<256x128xf32, #tpu.memory_space<vmem>>, vector<256x128xf32>
    %cst_8 = arith.constant dense<0.000000e+00> : vector<128x128xf32>
    %9 = tpu.matmul %7, %8, %cst_8 {dimension_numbers = #tpu.dot_dimension_numbers<[1], [0], [0], [1], [0, 0, 1, 1], [], []>} : vector<128x256xf32>, vector<256x128xf32>, vector<128x128xf32> -> vector<128x128xf32>
    %c0_9 = arith.constant 0 : index
    %c0_10 = arith.constant 0 : index
    %10 = vector.load %arg5[%c0_9, %c0_10] : memref<128x128xf32, #tpu.memory_space<vmem>>, vector<128x128xf32>
    tpu.vector_store %arg5[%c0_9, %c0_10], %9 {strides = array<i32>} : memref<128x128xf32, #tpu.memory_space<vmem>>, vector<128x128xf32>,
    return
  }
  func.func @transform_0(%arg0: i32) -> (i32, i32) {
    %c0_i32 = arith.constant 0 : i32
    %c0_i32_0 = arith.constant 0 : i32
    return %arg0, %c0_i32 : i32, i32
  }
  func.func @transform_1(%arg0: i32) -> (i32, i32) {
    %c0_i32 = arith.constant 0 : i32
    %c0_i32_0 = arith.constant 0 : i32
    %c0_i32_1 = arith.constant 0 : i32
    return %c0_i32, %c0_i32_0 : i32, i32
  }
  func.func @transform_2(%arg0: i32) -> (i32, i32) {
    %c0_i32 = arith.constant 0 : i32
    %c0_i32_0 = arith.constant 0 : i32
    %c0_i32_1 = arith.constant 0 : i32
    return %c0_i32, %c0_i32_0 : i32, i32
  }
  func.func @transform_3(%arg0: i32) -> (i32, i32) {
    %c0_i32 = arith.constant 0 : i32
    %c0_i32_0 = arith.constant 0 : i32
    %c0_i32_1 = arith.constant 0 : i32
    return %c0_i32, %c0_i32_0 : i32, i32
  }
  func.func @transform_4(%arg0: i32) -> (i32, i32) {
    %c0_i32 = arith.constant 0 : i32
    %c0_i32_0 = arith.constant 0 : i32
    return %arg0, %c0_i32 : i32, i32
  }
}

</mosaic_0001>

<llo_original>
// kernel: tpu_custom_call.1
$region0: #{tpu_custom_call.1}
  #allocation0 [shape = 'u32[]', space=smem, size = 0x4, offset = 0x4, fixed_abs, tag = 'smem constant byte address 0x4 - core index']
  #allocation1 [shape = 'u32[72,128]{1,0:T(1,128)}', space=vmem, size = 0x9000, scoped, tag = 'internal scratch']
  %s0 = inlined_call_operand.vmem [shape: f32[256,16], index: 0, kind: input, shape index: {}]
  %s1 = inlined_call_operand.vmem [shape: f32[16,256], index: 1, kind: input, shape index: {}]
  %s2 = inlined_call_operand.vmem [shape: f32[1,256], index: 2, kind: input, shape index: {}]
  %s3 = inlined_call_operand.vmem [shape: f32[256,128], index: 3, kind: input, shape index: {}]
  %s4 = inlined_call_operand.hbm [shape: f32[256,128], index: 4, kind: output, shape index: {}]
  %s5 = sld [smem:[#allocation0]]
  $region49: #{tpu_custom_call.1} parent=0
    _
  %s7 = ssub.s32 1, %s5
  %s8 = scalar_select 0, %s7, %s5
  $region1: #{tpu_custom_call.1} parent=0
    #allocation2 [shape = 'u8[131072]{0}', space=vmem, size = 0x20000, scoped, tag = 'output window, operand 0']
    #allocation3 [shape = 's32[2]{0}', space=sflag, size = 0x8, scoped, tag = 'scoped memory for tpu_custom_call.1']
    %9 = vsyncpa [#allocation3], 0
    %s10 = scalar_lea.sflag [#allocation3], 1
    %11 = vsyncpa %s10, 0
    loop: start=0, step=1, limit=4
    $region2: #{tpu_custom_call.1} parent=1 // loop_pre_header
      _
    $region3: #{tpu_custom_call.1} parent=1 // loop_header
      %s13 = sphi 0, %s17
      %p14 = scmp.ge.s32.totalorder %s13, 4
      %s23 = sphi 0, %s25
      %s26 = sphi 0, %s23
      %s27 = sphi 0, %s26
      %s43 = sphi 0, %s27
      %s47 = sphi 0, %s47
      %s49 = sphi 0, %s47
      %s50 = sphi 0, %s49
      %s64 = sphi 0, %s50
      %s68 = sphi 0, %s68
      %s70 = sphi 0, %s68
      %s71 = sphi 0, %s70
      %s85 = sphi 0, %s71
      %s89 = sphi 0, %s89
      %s91 = sphi 0, %s89
      %s92 = sphi 0, %s91
      %s106 = sphi 0, %s92
      %s112 = sphi 0, %s114
      %s115 = sphi 0, %s112
      %s116 = sphi 0, %s115
      %s132 = sphi 0, %s116
    $region4: #{tpu_custom_call.1} parent=1 // loop_header_branch
      %16 = sbr.rel (%p14) target = $region8
    $region5: #{tpu_custom_call.1} parent=1 // loop_body
      %s18 = ssub.s32 %s13, 1
      %s19 = ssub.s32 %s13, 2
      %s20 = sadd.s32 %s13, 1
      %s21 = ssub.s32 %s13, %s20
      %p22 = scmp.eq.s32.totalorder %s21, 0
      %s24 = sadd.s32 %s23, 1
      %s25 = scalar_select %p22, %s23, %s24
      %p28 = pneg %p22
      %p29 = scmp.eq.s32.totalorder %s13, 1
      %p30 = por %p28, %p29
      %p31 = scmp.ne.s32.totalorder %s23, %s26
      %p32 = scmp.eq.s32.totalorder %s13, 0
      %p33 = por %p31, %p32
      %p34 = scmp.ne.s32.totalorder %s23, %s26
      %p35 = scmp.eq.s32.totalorder %s18, 1
      %p36 = por %p34, %p35
      %p37 = scmp.ne.s32.totalorder %s26, %s27
      %p38 = scmp.eq.s32.totalorder %s18, 0
      %p39 = por %p37, %p38
      %p40 = scmp.ne.s32.totalorder %s26, %s27
      %p41 = scmp.eq.s32.totalorder %s19, 1
      %p42 = por %p40, %p41
      %p44 = scmp.ne.s32.totalorder %s27, %s43
      %p45 = scmp.eq.s32.totalorder %s19, 0
      %p46 = por %p44, %p45
      %s48 = sadd.s32 %s47, 1
      %p51 = scmp.eq.s32.totalorder %s13, 1
      %p52 = scmp.ne.s32.totalorder %s47, %s49
      %p53 = scmp.eq.s32.totalorder %s13, 0
      %p54 = por %p52, %p53
      %p55 = scmp.ne.s32.totalorder %s47, %s49
      %p56 = scmp.eq.s32.totalorder %s18, 1
      %p57 = por %p55, %p56
      %p58 = scmp.ne.s32.totalorder %s49, %s50
      %p59 = scmp.eq.s32.totalorder %s18, 0
      %p60 = por %p58, %p59
      %p61 = scmp.ne.s32.totalorder %s49, %s50
      %p62 = scmp.eq.s32.totalorder %s19, 1
      %p63 = por %p61, %p62
      %p65 = scmp.ne.s32.totalorder %s50, %s64
      %p66 = scmp.eq.s32.totalorder %s19, 0
      %p67 = por %p65, %p66
      %s69 = sadd.s32 %s68, 1
      %p72 = scmp.eq.s32.totalorder %s13, 1
      %p73 = scmp.ne.s32.totalorder %s68, %s70
      %p74 = scmp.eq.s32.totalorder %s13, 0
      %p75 = por %p73, %p74
      %p76 = scmp.ne.s32.totalorder %s68, %s70
      %p77 = scmp.eq.s32.totalorder %s18, 1
      %p78 = por %p76, %p77
      %p79 = scmp.ne.s32.totalorder %s70, %s71
      %p80 = scmp.eq.s32.totalorder %s18, 0
      %p81 = por %p79, %p80
      %p82 = scmp.ne.s32.totalorder %s70, %s71
      %p83 = scmp.eq.s32.totalorder %s19, 1
      %p84 = por %p82, %p83
      %p86 = scmp.ne.s32.totalorder %s71, %s85
      %p87 = scmp.eq.s32.totalorder %s19, 0
      %p88 = por %p86, %p87
      %s90 = sadd.s32 %s89, 1
      %p93 = scmp.eq.s32.totalorder %s13, 1
      %p94 = scmp.ne.s32.totalorder %s89, %s91
      %p95 = scmp.eq.s32.totalorder %s13, 0
      %p96 = por %p94, %p95
      %p97 = scmp.ne.s32.totalorder %s89, %s91
      %p98 = scmp.eq.s32.totalorder %s18, 1
      %p99 = por %p97, %p98
      %p100 = scmp.ne.s32.totalorder %s91, %s92
      %p101 = scmp.eq.s32.totalorder %s18, 0
      %p102 = por %p100, %p101
      %p103 = scmp.ne.s32.totalorder %s91, %s92
      %p104 = scmp.eq.s32.totalorder %s19, 1
      %p105 = por %p103, %p104
      %p107 = scmp.ne.s32.totalorder %s92, %s106
      %p108 = scmp.eq.s32.totalorder %s19, 0
      %p109 = por %p107, %p108
      %s110 = ssub.s32 %s13, %s20
      %p111 = scmp.eq.s32.totalorder %s110, 0
      %s113 = sadd.s32 %s112, 1
      %s114 = scalar_select %p111, %s112, %s113
      %p117 = pneg %p111
      %p118 = scmp.eq.s32.totalorder %s13, 1
      %p119 = por %p117, %p118
      %p120 = scmp.ne.s32.totalorder %s112, %s115
      %p121 = scmp.eq.s32.totalorder %s13, 0
      %p122 = por %p120, %p121
      %p123 = scmp.ne.s32.totalorder %s112, %s115
      %p124 = scmp.eq.s32.totalorder %s18, 1
      %p125 = por %p123, %p124
      %p126 = scmp.ne.s32.totalorder %s115, %s116
      %p127 = scmp.eq.s32.totalorder %s18, 0
      %p128 = por %p126, %p127
      %p129 = scmp.ne.s32.totalorder %s115, %s116
      %p130 = scmp.eq.s32.totalorder %s19, 1
      %p131 = por %p129, %p130
      %p133 = scmp.ne.s32.totalorder %s116, %s132
      %p134 = scmp.eq.s32.totalorder %s19, 0
      %p135 = por %p133, %p134
      %p136 = scmp.le.s32.totalorder 1, %s13
      %p137 = scmp.lt.s32.totalorder %s13, 3
      %p138 = pnand %p136, %p137
      %p139 = pneg %p138
      // Predicated region
      $region9: #{tpu_custom_call.1} parent=5 // pred_check
        _
      $region10: #{tpu_custom_call.1} parent=5 // pred_check_branch
        %141 = sbr.rel (%p138) target = $region12
      $region11: #{tpu_custom_call.1} parent=5 // pred_region
        %s142 = ssub.s32 %s13, 1
        // Predicated region
        $region13: #{tpu_custom_call.1} parent=11 // pred_check
          %p143 = pneg %p60
        $region14: #{tpu_custom_call.1} parent=11 // pred_check_branch
          %145 = sbr.rel (%p143) target = $region16
        $region15: #{tpu_custom_call.1} parent=11 // pred_region
          _
        $region16: #{tpu_custom_call.1} parent=11 // pred_fallthru
          _
        // Predicated region
        $region17: #{tpu_custom_call.1} parent=11 // pred_check
          %p146 = pneg %p81
        $region18: #{tpu_custom_call.1} parent=11 // pred_check_branch
          %148 = sbr.rel (%p146) target = $region20
        $region19: #{tpu_custom_call.1} parent=11 // pred_region
          _
        $region20: #{tpu_custom_call.1} parent=11 // pred_fallthru
          _
        // Predicated region
        $region21: #{tpu_custom_call.1} parent=11 // pred_check
          %p149 = pneg %p102
        $region22: #{tpu_custom_call.1} parent=11 // pred_check_branch
          %151 = sbr.rel (%p149) target = $region24
        $region23: #{tpu_custom_call.1} parent=11 // pred_region
          _
        $region24: #{tpu_custom_call.1} parent=11 // pred_fallthru
          _
      $region12: #{tpu_custom_call.1} parent=5 // pred_fallthru
        _
      %p152 = scmp.lt.s32.totalorder %s13, 2
      // Predicated region
      $region25: #{tpu_custom_call.1} parent=5 // pred_check
        %p153 = pneg %p152
      $region26: #{tpu_custom_call.1} parent=5 // pred_check_branch
        %155 = sbr.rel (%p153) target = $region28
      $region27: #{tpu_custom_call.1} parent=5 // pred_region
        // Predicated region
        $region29: #{tpu_custom_call.1} parent=27 // pred_check
          %p156 = pneg %p33
        $region30: #{tpu_custom_call.1} parent=27 // pred_check_branch
          %158 = sbr.rel (%p156) target = $region32
        $region31: #{tpu_custom_call.1} parent=27 // pred_region
          %s159 = smul.u32 16, %s13
          %p160 = scmp.lt.s32.totalorder %s159, 31
          %s161 = scalar_select %p160, %s159, 31
          %s162 = smul.addr %s161, 8
          %s163 = scalar_lea.vmem %s0, %s162
          %s164 = smul.u32 16, %s13
        $region32: #{tpu_custom_call.1} parent=27 // pred_fallthru
          _
      $region28: #{tpu_custom_call.1} parent=5 // pred_fallthru
        _
      %p165 = scmp.le.s32.totalorder 1, %s13
      %p166 = scmp.lt.s32.totalorder %s13, 3
      %p167 = pnand %p165, %p166
      %p168 = pneg %p167
      // Predicated region
      $region33: #{tpu_custom_call.1} parent=5 // pred_check
        _
      $region34: #{tpu_custom_call.1} parent=5 // pred_check_branch
        %170 = sbr.rel (%p167) target = $region36
      $region35: #{tpu_custom_call.1} parent=5 // pred_region
        %s171 = ssub.s32 %s13, 1
        %s172 = smul.u32 16, %s18
        %p173 = scmp.lt.s32.totalorder %s172, 31
        %s174 = scalar_select %p173, %s172, 31
        %s175 = smul.addr %s174, 8
        %s176 = scalar_lea.vmem %s0, %s175
        %p177 = pneg %p39
        %p178 = pneg %p36
        %p179 = pneg %p60
        %p180 = pneg %p57
        %p181 = pneg %p81
        %p182 = pneg %p78
        %p183 = pneg %p102
        %p184 = pneg %p99
        %p185 = pneg %p128
        %p186 = pneg %p125
        %s187 = sand.u32 %s115, 1
        %s188 = scalar_lea.sflag [#allocation3], %s187
        %s189 = sand.u32 %s115, 1
        %s190 = smul.addr %s189, 128
        %s191 = scalar_lea.vmem [#allocation2], %s190
        %s192 = smul.u32 16, %s18
        %p193 = scmp.lt.s32.totalorder %s192, 31
        %s194 = scalar_select %p193, %s192, 31
        %s195 = smul.addr %s194, 8
        %s196 = scalar_lea.vmem %s0, %s195
        %s197 = smul.u32 16, %s18
        %s198 = smul.u32 16, %s18
        %v199 = vld [vmem:[%s196] sm:$0xff]
        %v200 = vld [vmem:[%s196 + $0x8] sm:$0xff]
        %v201 = vld [vmem:[%s196 + $0x10] sm:$0xff]
        %v202 = vld [vmem:[%s196 + $0x18] sm:$0xff]
        %v203 = vld [vmem:[%s196 + $0x20] sm:$0xff]
        %v204 = vld [vmem:[%s196 + $0x28] sm:$0xff]
        %v205 = vld [vmem:[%s196 + $0x30] sm:$0xff]
        %v206 = vld [vmem:[%s196 + $0x38] sm:$0xff]
        %v207 = vld [vmem:[%s196 + $0x40] sm:$0xff]
        %v208 = vld [vmem:[%s196 + $0x48] sm:$0xff]
        %v209 = vld [vmem:[%s196 + $0x50] sm:$0xff]
        %v210 = vld [vmem:[%s196 + $0x58] sm:$0xff]
        %v211 = vld [vmem:[%s196 + $0x60] sm:$0xff]
        %v212 = vld [vmem:[%s196 + $0x68] sm:$0xff]
        %v213 = vld [vmem:[%s196 + $0x70] sm:$0xff]
        %v214 = vld [vmem:[%s196 + $0x78] sm:$0xff]
        %v215 = vld [vmem:[%s1] sm:$0xff]
        %v216 = vld [vmem:[%s1 + $0x8] sm:$0xff]
        %v217 = vld [vmem:[%s1 + $0x10] sm:$0xff]
        %v218 = vld [vmem:[%s1 + $0x18] sm:$0xff]
        %v219 = vld [vmem:[%s2] sm:$0x3]
        %v221 = vperm.slane %v219, 0
        %v222 = vperm.slane %v219, 1
        %vm225 = vcmask 130048
        %v227 = vsel %vm225, %v199, 0
        %v230 = vsel %vm225, %v200, 0
        %v233 = vsel %vm225, %v201, 0
        %v236 = vsel %vm225, %v202, 0
        %v239 = vsel %vm225, %v203, 0
        %v242 = vsel %vm225, %v204, 0
        %v245 = vsel %vm225, %v205, 0
        %v248 = vsel %vm225, %v206, 0
        %v251 = vsel %vm225, %v207, 0
        %v254 = vsel %vm225, %v208, 0
        %v257 = vsel %vm225, %v209, 0
        %v260 = vsel %vm225, %v210, 0
        %v263 = vsel %vm225, %v211, 0
        %v266 = vsel %vm225, %v212, 0
        %v269 = vsel %vm225, %v213, 0
        %v272 = vsel %vm225, %v214, 0
        %274 = vmatpush.msra.mxu0 0.0
        %275 = vmatpush.msra.mxu0 0.0
        %276 = vmatpush.msra.mxu0 0.0
        %277 = vmatpush.msra.mxu0 0.0
        %278 = vmatpush.msra.mxu0 0.0
        %279 = vmatpush.msra.mxu0 0.0
        %280 = vmatpush.msra.mxu0 0.0
        %281 = vmatpush.msra.mxu0 0.0
        %282 = vmatpush.msra.mxu0 0.0
        %283 = vmatpush.msra.mxu0 0.0
        %284 = vmatpush.msra.mxu0 0.0
        %285 = vmatpush.msra.mxu0 0.0
        %286 = vmatpush.msra.mxu0 0.0
        %287 = vmatpush.msra.mxu0 0.0
        %288 = vmatpush.msra.mxu0 %v217
        %289 = vmatpush.msra.mxu0 %v215
        %290 = vmatmul.f32.gmra.mxu0 %v227
        %v291 = vpop.f32.mrf.mxu0
        %v292 = vadd.f32 %v221, %v291
        %293 = vmatmul.f32.gmra.mxu0 %v230
        %v294 = vpop.f32.mrf.mxu0
        %v295 = vadd.f32 %v221, %v294
        %296 = vmatmul.f32.gmra.mxu0 %v233
        %v297 = vpop.f32.mrf.mxu0
        %v298 = vadd.f32 %v221, %v297
        %299 = vmatmul.f32.gmra.mxu0 %v236
        %v300 = vpop.f32.mrf.mxu0
        %v301 = vadd.f32 %v221, %v300
        %302 = vmatmul.f32.gmra.mxu0 %v239
        %v303 = vpop.f32.mrf.mxu0
        %v304 = vadd.f32 %v221, %v303
        %305 = vmatmul.f32.gmra.mxu0 %v242
        %v306 = vpop.f32.mrf.mxu0
        %v307 = vadd.f32 %v221, %v306
        %308 = vmatmul.f32.gmra.mxu0 %v245
        %v309 = vpop.f32.mrf.mxu0
        %v310 = vadd.f32 %v221, %v309
        %311 = vmatmul.f32.gmra.mxu0 %v248
        %v312 = vpop.f32.mrf.mxu0
        %v313 = vadd.f32 %v221, %v312
        %314 = vmatmul.f32.gmra.mxu0 %v251
        %v315 = vpop.f32.mrf.mxu0
        %v316 = vadd.f32 %v221, %v315
        %317 = vmatmul.f32.gmra.mxu0 %v254
        %v318 = vpop.f32.mrf.mxu0
        %v319 = vadd.f32 %v221, %v318
        %320 = vmatmul.f32.gmra.mxu0 %v257
        %v321 = vpop.f32.mrf.mxu0
        %v322 = vadd.f32 %v221, %v321
        %323 = vmatmul.f32.gmra.mxu0 %v260
        %v324 = vpop.f32.mrf.mxu0
        %v325 = vadd.f32 %v221, %v324
        %326 = vmatmul.f32.gmra.mxu0 %v263
        %v327 = vpop.f32.mrf.mxu0
        %v328 = vadd.f32 %v221, %v327
        %329 = vmatmul.f32.gmra.mxu0 %v266
        %v330 = vpop.f32.mrf.mxu0
        %v331 = vadd.f32 %v221, %v330
        %332 = vmatmul.f32.gmra.mxu0 %v269
        %v333 = vpop.f32.mrf.mxu0
        %v334 = vadd.f32 %v221, %v333
        %335 = vmatmul.f32.gmra.mxu0 %v272
        %v336 = vpop.f32.mrf.mxu0
        %v337 = vadd.f32 %v221, %v336
        %338 = vdwg.mxu0
        %339 = vmatpush.msra.mxu0 0.0
        %340 = vmatpush.msra.mxu0 0.0
        %341 = vmatpush.msra.mxu0 0.0
        %342 = vmatpush.msra.mxu0 0.0
        %343 = vmatpush.msra.mxu0 0.0
        %344 = vmatpush.msra.mxu0 0.0
        %345 = vmatpush.msra.mxu0 0.0
        %346 = vmatpush.msra.mxu0 0.0
        %347 = vmatpush.msra.mxu0 0.0
        %348 = vmatpush.msra.mxu0 0.0
        %349 = vmatpush.msra.mxu0 0.0
        %350 = vmatpush.msra.mxu0 0.0
        %351 = vmatpush.msra.mxu0 0.0
        %352 = vmatpush.msra.mxu0 0.0
        %353 = vmatpush.msra.mxu0 %v218
        %354 = vmatpush.msra.mxu0 %v216
        %355 = vmatmul.f32.gmra.mxu0 %v227
        %v356 = vpop.f32.mrf.mxu0
        %v357 = vadd.f32 %v222, %v356
        %358 = vmatmul.f32.gmra.mxu0 %v230
        %v359 = vpop.f32.mrf.mxu0
        %v360 = vadd.f32 %v222, %v359
        %361 = vmatmul.f32.gmra.mxu0 %v233
        %v362 = vpop.f32.mrf.mxu0
        %v363 = vadd.f32 %v222, %v362
        %364 = vmatmul.f32.gmra.mxu0 %v236
        %v365 = vpop.f32.mrf.mxu0
        %v366 = vadd.f32 %v222, %v365
        %367 = vmatmul.f32.gmra.mxu0 %v239
        %v368 = vpop.f32.mrf.mxu0
        %v369 = vadd.f32 %v222, %v368
        %370 = vmatmul.f32.gmra.mxu0 %v242
        %v371 = vpop.f32.mrf.mxu0
        %v372 = vadd.f32 %v222, %v371
        %373 = vmatmul.f32.gmra.mxu0 %v245
        %v374 = vpop.f32.mrf.mxu0
        %v375 = vadd.f32 %v222, %v374
        %376 = vmatmul.f32.gmra.mxu0 %v248
        %v377 = vpop.f32.mrf.mxu0
        %v378 = vadd.f32 %v222, %v377
        %379 = vmatmul.f32.gmra.mxu0 %v251
        %v380 = vpop.f32.mrf.mxu0
        %v381 = vadd.f32 %v222, %v380
        %382 = vmatmul.f32.gmra.mxu0 %v254
        %v383 = vpop.f32.mrf.mxu0
        %v384 = vadd.f32 %v222, %v383
        %385 = vmatmul.f32.gmra.mxu0 %v257
        %v386 = vpop.f32.mrf.mxu0
        %v387 = vadd.f32 %v222, %v386
        %388 = vmatmul.f32.gmra.mxu0 %v260
        %v389 = vpop.f32.mrf.mxu0
        %v390 = vadd.f32 %v222, %v389
        %391 = vmatmul.f32.gmra.mxu0 %v263
        %v392 = vpop.f32.mrf.mxu0
        %v393 = vadd.f32 %v222, %v392
        %394 = vmatmul.f32.gmra.mxu0 %v266
        %v395 = vpop.f32.mrf.mxu0
        %v396 = vadd.f32 %v222, %v395
        %397 = vmatmul.f32.gmra.mxu0 %v269
        %v398 = vpop.f32.mrf.mxu0
        %v399 = vadd.f32 %v222, %v398
        %400 = vmatmul.f32.gmra.mxu0 %v272
        %v401 = vpop.f32.mrf.mxu0
        %v402 = vadd.f32 %v222, %v401
        %403 = vdwg.mxu0
        %v404 = vmax.f32 %v292, 0.0
        %v405 = vmax.f32 %v357, 0.0
        %v406 = vmax.f32 %v295, 0.0
        %v407 = vmax.f32 %v360, 0.0
        %v408 = vmax.f32 %v298, 0.0
        %v409 = vmax.f32 %v363, 0.0
        %v410 = vmax.f32 %v301, 0.0
        %v411 = vmax.f32 %v366, 0.0
        %v412 = vmax.f32 %v304, 0.0
        %v413 = vmax.f32 %v369, 0.0
        %v414 = vmax.f32 %v307, 0.0
        %v415 = vmax.f32 %v372, 0.0
        %v416 = vmax.f32 %v310, 0.0
        %v417 = vmax.f32 %v375, 0.0
        %v418 = vmax.f32 %v313, 0.0
        %v419 = vmax.f32 %v378, 0.0
        %v420 = vmax.f32 %v316, 0.0
        %v421 = vmax.f32 %v381, 0.0
        %v422 = vmax.f32 %v319, 0.0
        %v423 = vmax.f32 %v384, 0.0
        %v424 = vmax.f32 %v322, 0.0
        %v425 = vmax.f32 %v387, 0.0
        %v426 = vmax.f32 %v325, 0.0
        %v427 = vmax.f32 %v390, 0.0
        %v428 = vmax.f32 %v328, 0.0
        %v429 = vmax.f32 %v393, 0.0
        %v430 = vmax.f32 %v331, 0.0
        %v431 = vmax.f32 %v396, 0.0
        %v432 = vmax.f32 %v334, 0.0
        %v433 = vmax.f32 %v399, 0.0
        %v434 = vmax.f32 %v337, 0.0
        %v435 = vmax.f32 %v402, 0.0
        %v436 = vld [vmem:[%s3] sm:$0xff]
        %v437 = vld [vmem:[%s3 + $0x8] sm:$0xff]
        %v438 = vld [vmem:[%s3 + $0x10] sm:$0xff]
        %v439 = vld [vmem:[%s3 + $0x18] sm:$0xff]
        %v440 = vld [vmem:[%s3 + $0x20] sm:$0xff]
        %v441 = vld [vmem:[%s3 + $0x28] sm:$0xff]
        %v442 = vld [vmem:[%s3 + $0x30] sm:$0xff]
        %v443 = vld [vmem:[%s3 + $0x38] sm:$0xff]
        %v444 = vld [vmem:[%s3 + $0x40] sm:$0xff]
        %v445 = vld [vmem:[%s3 + $0x48] sm:$0xff]
        %v446 = vld [vmem:[%s3 + $0x50] sm:$0xff]
        %v447 = vld [vmem:[%s3 + $0x58] sm:$0xff]
        %v448 = vld [vmem:[%s3 + $0x60] sm:$0xff]
        %v449 = vld [vmem:[%s3 + $0x68] sm:$0xff]
        %v450 = vld [vmem:[%s3 + $0x70] sm:$0xff]
        %v451 = vld [vmem:[%s3 + $0x78] sm:$0xff]
        %v452 = vld [vmem:[%s3 + $0x80] sm:$0xff]
        %v453 = vld [vmem:[%s3 + $0x88] sm:$0xff]
        %v454 = vld [vmem:[%s3 + $0x90] sm:$0xff]
        %v455 = vld [vmem:[%s3 + $0x98] sm:$0xff]
        %v456 = vld [vmem:[%s3 + $0xa0] sm:$0xff]
        %v457 = vld [vmem:[%s3 + $0xa8] sm:$0xff]
        %v458 = vld [vmem:[%s3 + $0xb0] sm:$0xff]
        %v459 = vld [vmem:[%s3 + $0xb8] sm:$0xff]
        %v460 = vld [vmem:[%s3 + $0xc0] sm:$0xff]
        %v461 = vld [vmem:[%s3 + $0xc8] sm:$0xff]
        %v462 = vld [vmem:[%s3 + $0xd0] sm:$0xff]
        %v463 = vld [vmem:[%s3 + $0xd8] sm:$0xff]
        %v464 = vld [vmem:[%s3 + $0xe0] sm:$0xff]
        %v465 = vld [vmem:[%s3 + $0xe8] sm:$0xff]
        %v466 = vld [vmem:[%s3 + $0xf0] sm:$0xff]
        %v467 = vld [vmem:[%s3 + $0xf8] sm:$0xff]
        %468 = vmatpush.msra.mxu0 %v451
        %469 = vmatpush.msra.mxu0 %v450
        %470 = vmatpush.msra.mxu0 %v449
        %471 = vmatpush.msra.mxu0 %v448
        %472 = vmatpush.msra.mxu0 %v447
        %473 = vmatpush.msra.mxu0 %v446
        %474 = vmatpush.msra.mxu0 %v445
        %475 = vmatpush.msra.mxu0 %v444
        %476 = vmatpush.msra.mxu0 %v443
        %477 = vmatpush.msra.mxu0 %v442
        %478 = vmatpush.msra.mxu0 %v441
        %479 = vmatpush.msra.mxu0 %v440
        %480 = vmatpush.msra.mxu0 %v439
        %481 = vmatpush.msra.mxu0 %v438
        %482 = vmatpush.msra.mxu0 %v437
        %483 = vmatpush.msra.mxu0 %v436
        %484 = vmatmul.f32.gmra.mxu0 %v404
        %v485 = vpop.f32.mrf.mxu0
        %v486 = vadd.f32 0.0, %v485
        %487 = vmatmul.f32.gmra.mxu0 %v406
        %v488 = vpop.f32.mrf.mxu0
        %v489 = vadd.f32 0.0, %v488
        %490 = vmatmul.f32.gmra.mxu0 %v408
        %v491 = vpop.f32.mrf.mxu0
        %v492 = vadd.f32 0.0, %v491
        %493 = vmatmul.f32.gmra.mxu0 %v410
        %v494 = vpop.f32.mrf.mxu0
        %v495 = vadd.f32 0.0, %v494
        %496 = vmatmul.f32.gmra.mxu0 %v412
        %v497 = vpop.f32.mrf.mxu0
        %v498 = vadd.f32 0.0, %v497
        %499 = vmatmul.f32.gmra.mxu0 %v414
        %v500 = vpop.f32.mrf.mxu0
        %v501 = vadd.f32 0.0, %v500
        %502 = vmatmul.f32.gmra.mxu0 %v416
        %v503 = vpop.f32.mrf.mxu0
        %v504 = vadd.f32 0.0, %v503
        %505 = vmatmul.f32.gmra.mxu0 %v418
        %v506 = vpop.f32.mrf.mxu0
        %v507 = vadd.f32 0.0, %v506
        %508 = vmatmul.f32.gmra.mxu0 %v420
        %v509 = vpop.f32.mrf.mxu0
        %v510 = vadd.f32 0.0, %v509
        %511 = vmatmul.f32.gmra.mxu0 %v422
        %v512 = vpop.f32.mrf.mxu0
        %v513 = vadd.f32 0.0, %v512
        %514 = vmatmul.f32.gmra.mxu0 %v424
        %v515 = vpop.f32.mrf.mxu0
        %v516 = vadd.f32 0.0, %v515
        %517 = vmatmul.f32.gmra.mxu0 %v426
        %v518 = vpop.f32.mrf.mxu0
        %v519 = vadd.f32 0.0, %v518
        %520 = vmatmul.f32.gmra.mxu0 %v428
        %v521 = vpop.f32.mrf.mxu0
        %v522 = vadd.f32 0.0, %v521
        %523 = vmatmul.f32.gmra.mxu0 %v430
        %v524 = vpop.f32.mrf.mxu0
        %v525 = vadd.f32 0.0, %v524
        %526 = vmatmul.f32.gmra.mxu0 %v432
        %v527 = vpop.f32.mrf.mxu0
        %v528 = vadd.f32 0.0, %v527
        %529 = vmatmul.f32.gmra.mxu0 %v434
        %v530 = vpop.f32.mrf.mxu0
        %v531 = vadd.f32 0.0, %v530
        %532 = vdwg.mxu0
        %533 = vmatpush.msra.mxu0 %v467
        %534 = vmatpush.msra.mxu0 %v466
        %535 = vmatpush.msra.mxu0 %v465
        %536 = vmatpush.msra.mxu0 %v464
        %537 = vmatpush.msra.mxu0 %v463
        %538 = vmatpush.msra.mxu0 %v462
        %539 = vmatpush.msra.mxu0 %v461
        %540 = vmatpush.msra.mxu0 %v460
        %541 = vmatpush.msra.mxu0 %v459
        %542 = vmatpush.msra.mxu0 %v458
        %543 = vmatpush.msra.mxu0 %v457
        %544 = vmatpush.msra.mxu0 %v456
        %545 = vmatpush.msra.mxu0 %v455
        %546 = vmatpush.msra.mxu0 %v454
        %547 = vmatpush.msra.mxu0 %v453
        %548 = vmatpush.msra.mxu0 %v452
        %549 = vmatmul.f32.gmra.mxu0 %v405
        %v550 = vpop.f32.mrf.mxu0
        %v551 = vadd.f32 %v486, %v550
        %552 = vmatmul.f32.gmra.mxu0 %v407
        %v553 = vpop.f32.mrf.mxu0
        %v554 = vadd.f32 %v489, %v553
        %555 = vmatmul.f32.gmra.mxu0 %v409
        %v556 = vpop.f32.mrf.mxu0
        %v557 = vadd.f32 %v492, %v556
        %558 = vmatmul.f32.gmra.mxu0 %v411
        %v559 = vpop.f32.mrf.mxu0
        %v560 = vadd.f32 %v495, %v559
        %561 = vmatmul.f32.gmra.mxu0 %v413
        %v562 = vpop.f32.mrf.mxu0
        %v563 = vadd.f32 %v498, %v562
        %564 = vmatmul.f32.gmra.mxu0 %v415
        %v565 = vpop.f32.mrf.mxu0
        %v566 = vadd.f32 %v501, %v565
        %567 = vmatmul.f32.gmra.mxu0 %v417
        %v568 = vpop.f32.mrf.mxu0
        %v569 = vadd.f32 %v504, %v568
        %570 = vmatmul.f32.gmra.mxu0 %v419
        %v571 = vpop.f32.mrf.mxu0
        %v572 = vadd.f32 %v507, %v571
        %573 = vmatmul.f32.gmra.mxu0 %v421
        %v574 = vpop.f32.mrf.mxu0
        %v575 = vadd.f32 %v510, %v574
        %576 = vmatmul.f32.gmra.mxu0 %v423
        %v577 = vpop.f32.mrf.mxu0
        %v578 = vadd.f32 %v513, %v577
        %579 = vmatmul.f32.gmra.mxu0 %v425
        %v580 = vpop.f32.mrf.mxu0
        %v581 = vadd.f32 %v516, %v580
        %582 = vmatmul.f32.gmra.mxu0 %v427
        %v583 = vpop.f32.mrf.mxu0
        %v584 = vadd.f32 %v519, %v583
        %585 = vmatmul.f32.gmra.mxu0 %v429
        %v586 = vpop.f32.mrf.mxu0
        %v587 = vadd.f32 %v522, %v586
        %588 = vmatmul.f32.gmra.mxu0 %v431
        %v589 = vpop.f32.mrf.mxu0
        %v590 = vadd.f32 %v525, %v589
        %591 = vmatmul.f32.gmra.mxu0 %v433
        %v592 = vpop.f32.mrf.mxu0
        %v593 = vadd.f32 %v528, %v592
        %594 = vmatmul.f32.gmra.mxu0 %v435
        %v595 = vpop.f32.mrf.mxu0
        %v596 = vadd.f32 %v531, %v595
        %597 = vdwg.mxu0
        %598 = vst [vmem:[%s191] sm:$0xff] %v551
        %599 = vst [vmem:[%s191 + $0x8] sm:$0xff] %v554
        %600 = vst [vmem:[%s191 + $0x10] sm:$0xff] %v557
        %601 = vst [vmem:[%s191 + $0x18] sm:$0xff] %v560
        %602 = vst [vmem:[%s191 + $0x20] sm:$0xff] %v563
        %603 = vst [vmem:[%s191 + $0x28] sm:$0xff] %v566
        %604 = vst [vmem:[%s191 + $0x30] sm:$0xff] %v569
        %605 = vst [vmem:[%s191 + $0x38] sm:$0xff] %v572
        %606 = vst [vmem:[%s191 + $0x40] sm:$0xff] %v575
        %607 = vst [vmem:[%s191 + $0x48] sm:$0xff] %v578
        %608 = vst [vmem:[%s191 + $0x50] sm:$0xff] %v581
        %609 = vst [vmem:[%s191 + $0x58] sm:$0xff] %v584
        %610 = vst [vmem:[%s191 + $0x60] sm:$0xff] %v587
        %611 = vst [vmem:[%s191 + $0x68] sm:$0xff] %v590
        %612 = vst [vmem:[%s191 + $0x70] sm:$0xff] %v593
        %613 = vst [vmem:[%s191 + $0x78] sm:$0xff] %v596
        %s614 = sand.u32 %s115, 1
        %s615 = scalar_lea.sflag [#allocation3], %s614
        %s616 = sand.u32 %s115, 1
        %s617 = smul.addr %s616, 128
        %s618 = scalar_lea.vmem [#allocation2], %s617
        // Predicated region
        $region37: #{tpu_custom_call.1} parent=35 // pred_check
          %p619 = pneg %p125
        $region38: #{tpu_custom_call.1} parent=35 // pred_check_branch
          %621 = sbr.rel (%p619) target = $region40
        $region39: #{tpu_custom_call.1} parent=35 // pred_region
          %s622 = smul.u32 16, %s18
          %624 = vsyncadd %s615, 0
          %s625 = smul.addr %s622, 8
          %s626 = scalar_lea.hbm %s4, %s625
          %s627 = sshll.u32 %s618, 4
          %s628 = int_to_ptr.vmem [resolvable:$true] %s627
          %s629 = sshll.u32 %s626, 4
          %s630 = int_to_ptr.hbm [resolvable:$true] %s629
          %635 = dma.vmem_to_hbm [thread:$0]  %s628, 2048, %s630, %s615, 128, 128, 8
        $region40: #{tpu_custom_call.1} parent=35 // pred_fallthru
          _
      $region36: #{tpu_custom_call.1} parent=5 // pred_fallthru
        _
      %p636 = scmp.le.s32.totalorder 2, %s13
      // Predicated region
      $region41: #{tpu_custom_call.1} parent=5 // pred_check
        %p637 = pneg %p636
      $region42: #{tpu_custom_call.1} parent=5 // pred_check_branch
        %639 = sbr.rel (%p637) target = $region44
      $region43: #{tpu_custom_call.1} parent=5 // pred_region
        %s640 = ssub.s32 %s13, 2
        // Predicated region
        $region45: #{tpu_custom_call.1} parent=43 // pred_check
          %p641 = pneg %p131
        $region46: #{tpu_custom_call.1} parent=43 // pred_check_branch
          %643 = sbr.rel (%p641) target = $region48
        $region47: #{tpu_custom_call.1} parent=43 // pred_region
          %s644 = sand.u32 %s116, 1
          %s645 = scalar_lea.sflag [#allocation3], %s644
          %s646 = sand.u32 %s116, 1
          %s647 = smul.addr %s646, 128
          %s648 = scalar_lea.vmem [#allocation2], %s647
          %650 = dma.done %s645, 2048
        $region48: #{tpu_custom_call.1} parent=43 // pred_fallthru
          _
      $region44: #{tpu_custom_call.1} parent=5 // pred_fallthru
        _
    $region6: #{tpu_custom_call.1} parent=1 // loop_footer
      %s17 = sadd.s32 1, %s13
    $region7: #{tpu_custom_call.1} parent=1 // loop_footer_branch
      %12 = sbr.rel target = $region3
    $region8: #{tpu_custom_call.1} parent=1 // loop_exit
      _
    %651 = vsyncpa [#allocation3], 1
    %s652 = scalar_lea.sflag [#allocation3], 1
    %653 = vsyncpa %s652, 1

</llo_original>
